<compile_context>
chip_gen: v6e
topology: v6e:2x2x1
jax: 0.10.0
libtpu: 0.0.40
codegen_flags: <defaults>
</compile_context>

<pallas_src>
import functools

import numpy as np
import jax
import jax.numpy as jnp
from jax import lax
from jax.experimental import pallas as pl
from jax.experimental.pallas import tpu as pltpu

EPS = 1e-5  # nn.LayerNorm default


def _round_up(x, m):
    return ((x + m - 1) // m) * m


def _cdiv(a, b):
    return -(-a // b)


def _vmem_budget():
    """Generation-aware VMEM budget (~75% of capacity), clamped to a safe range."""
    cap = None
    try:
        info = pltpu.get_tpu_info()
        cap = getattr(info, "vmem_capacity_bytes", None)
    except Exception:
        cap = None
    if not cap:
        cap = 64 * 1024 * 1024            # conservative (v7x-sized) fallback
    budget = int(cap * 0.75)              # ~96 MiB on v5e/v6e, ~48 MiB on v7x
    return max(32 * 1024 * 1024, min(budget, 100 * 1024 * 1024))


def _layernorm(x, gamma, beta):
    mean = jnp.mean(x, axis=-1, keepdims=True)
    var = jnp.mean(jnp.square(x - mean), axis=-1, keepdims=True)
    return (x - mean) * lax.rsqrt(var + EPS) * gamma + beta


# --------------------------------------------------------------------------
# Kernel A: SegMerging hot path  (LayerNorm(win*seg_dim) + Linear -> seg_dim)
# Row-tiled: each grid step handles a (TR, win*seg_dim) slab.
# --------------------------------------------------------------------------
def seg_merge_kernel(x_ref, g_ref, b_ref, w_ref, wb_ref, o_ref):
    x = x_ref[...]                                      # (TR, wd) f32
    xn = _layernorm(x, g_ref[...], b_ref[...])          # f32 math
    o_ref[...] = (
        jnp.dot(xn.astype(jnp.bfloat16), w_ref[...],    # bf16 x bf16 -> f32 acc
                preferred_element_type=jnp.float32) + wb_ref[...]
    )


def seg_merging(x, n_feat, mp, win_size, vmem_budget):
    """x: (B*n_feat, n_seg, seg_dim) -> (B*n_feat, n_seg', seg_dim)."""
    bn, n_seg, seg_dim = x.shape
    B = bn // n_feat
    x = x.reshape(B, n_feat, n_seg, seg_dim)
    pad = n_seg % win_size
    if pad != 0:                                        # pad by repeating tail segs
        pad = win_size - pad
        x = jnp.concatenate([x, x[:, :, -pad:, :]], axis=-2)
    n_seg_pad = x.shape[2]
    n_seg2 = n_seg_pad // win_size
    wd = win_size * seg_dim
    # The strided-slice interleave + concat is identical to a plain reshape:
    # output row t = segments [t*win .. t*win+win-1] concatenated on features.
    xm = x.reshape(B * n_feat * n_seg2, wd)

    R = xm.shape[0]
    # balanced row blocks (no near-2x zero padding), capped by the VMEM budget
    row_bytes = (wd + seg_dim) * 4 * 3                  # in + out, double-buffered-ish
    tr_cap = max(8, int(vmem_budget * 0.5) // max(row_bytes, 1))
    tr_cap = min(tr_cap, 2048)
    nblk = max(1, _cdiv(R, tr_cap))
    if nblk == 1 and R > 8:
        nblk = 2                                        # keep both TCs busy (v7x)
    TR = _round_up(_cdiv(R, nblk), 8)
    nblk = _cdiv(R, TR)
    R_pad = nblk * TR
    if R_pad != R:
        xm = jnp.concatenate([xm, jnp.zeros((R_pad - R, wd), xm.dtype)], axis=0)

    # TODO(synk): for seg_dim < 128 a lane-dense packed out_spec
    # ((R_pad*seg_dim/128, 128)) would remove masked vst's; skipped here since
    # the required in-kernel (TR,seg_dim)->(TR*seg_dim/128,128) repack may cost
    # more XLU than the masked stores it removes at these sizes.
    out = pl.pallas_call(
        seg_merge_kernel,
        grid=(nblk,),
        in_specs=[
            pl.BlockSpec((TR, wd), lambda i: (i, 0)),
            pl.BlockSpec((1, wd), lambda i: (0, 0)),
            pl.BlockSpec((1, wd), lambda i: (0, 0)),
            pl.BlockSpec((wd, seg_dim), lambda i: (0, 0)),
            pl.BlockSpec((1, seg_dim), lambda i: (0, 0)),
        ],
        out_specs=pl.BlockSpec((TR, seg_dim), lambda i: (i, 0)),
        out_shape=jax.ShapeDtypeStruct((R_pad, seg_dim), jnp.float32),
        compiler_params=pltpu.CompilerParams(
            dimension_semantics=("parallel",),
            vmem_limit_bytes=vmem_budget),
    )(xm, mp["norm_g"], mp["norm_b"], mp["w_t"], mp["b"])
    return out[:R].reshape(B * n_feat, n_seg2, seg_dim)


# --------------------------------------------------------------------------
# Kernel B: all `depth` post-norm TransformerEncoderLayers fused.
# Grid = (batch_blocks [parallel], layers [arbitrary]); activations stay in a
# VMEM scratch across the layer axis; weights are VMEM-resident when they fit.
# --------------------------------------------------------------------------
def encoder_layers_kernel(x_ref, wqkv_ref, bqkv_ref, wo_ref, bo_ref,
                          g1_ref, be1_ref, w1_ref, b1_ref, w2_ref, b2_ref,
                          g2_ref, be2_ref, o_ref, acc_ref, *, n_heads, resident):
    l = pl.program_id(1)
    n_layers = pl.num_programs(1)

    @pl.when(l == 0)
    def _():
        acc_ref[...] = x_ref[...]                        # load activations once

    TB, S, D = acc_ref.shape
    hd = D // n_heads
    N = TB * S

    li = l if resident else 0                            # resident: whole stack in VMEM
    wqkv = wqkv_ref[li]                                  # (D, 3D) bf16
    bqkv = bqkv_ref[li]                                  # (1, 3D) f32
    wo = wo_ref[li]
    bo = bo_ref[li]
    g1 = g1_ref[li]
    be1 = be1_ref[li]
    w1 = w1_ref[li]
    b1 = b1_ref[li]
    w2 = w2_ref[li]
    b2 = b2_ref[li]
    g2 = g2_ref[li]
    be2 = be2_ref[li]

    xf = acc_ref[...].reshape(N, D)                      # flattened rows for matmuls
    xh = xf.astype(jnp.bfloat16)

    # Fused q/k/v projection: one (N, D) x (D, 3D) dot; 1/sqrt(hd) is folded
    # into the q columns / q bias at prep time.
    qkv = jnp.dot(xh, wqkv, preferred_element_type=jnp.float32) + bqkv
    q3 = qkv[:, :D].reshape(TB, S, D)
    k3 = qkv[:, D:2 * D].reshape(TB, S, D)
    v3 = qkv[:, 2 * D:].reshape(TB, S, D)

    # All heads batched into one einsum pair (batch = n_heads * TB).
    def split_heads(t):                                  # (TB, S, D) -> (H*TB, S, hd)
        return jnp.concatenate(
            [t[:, :, h * hd:(h + 1) * hd] for h in range(n_heads)], axis=0)

    qh = split_heads(q3).astype(jnp.bfloat16)
    kh = split_heads(k3).astype(jnp.bfloat16)
    vh = split_heads(v3).astype(jnp.bfloat16)
    s = jnp.einsum('bqd,bkd->bqk', qh, kh,
                   preferred_element_type=jnp.float32)   # (H*TB, S, S)
    s = s - jnp.max(s, axis=-1, keepdims=True)
    e = jnp.exp(s)
    p = e * pl.reciprocal(jnp.sum(e, axis=-1, keepdims=True), approx=True)
    ah = jnp.einsum('bqk,bkd->bqd', p.astype(jnp.bfloat16), vh,
                    preferred_element_type=jnp.float32)  # (H*TB, S, hd)

    # Merge heads back to (N, D) and apply ONE full-K output projection.
    attn = jnp.concatenate(
        [ah[h * TB:(h + 1) * TB].reshape(N, hd) for h in range(n_heads)], axis=-1)
    attn = jnp.dot(attn.astype(jnp.bfloat16), wo,
                   preferred_element_type=jnp.float32) + bo

    x1 = _layernorm(xf + attn, g1, be1)                  # norm1 (post-norm)
    h1 = jnp.maximum(
        jnp.dot(x1.astype(jnp.bfloat16), w1,
                preferred_element_type=jnp.float32) + b1, 0.0)     # ReLU FFN
    h2 = jnp.dot(h1.astype(jnp.bfloat16), w2,
                 preferred_element_type=jnp.float32) + b2
    y = _layernorm(x1 + h2, g2, be2).reshape(TB, S, D)   # norm2

    @pl.when(l < n_layers - 1)
    def _():
        acc_ref[...] = y                                 # stays resident in VMEM

    @pl.when(l == n_layers - 1)
    def _():
        o_ref[...] = y                                   # final layer: straight to output


def transformer_encoder_layers(x, ep, n_heads, vmem_budget):
    BN, S, D = x.shape
    L = ep["wqkv_t"].shape[0]
    d_ff = ep["w1_t"].shape[-1]

    # Decide whether the whole stacked-weight set stays resident in VMEM.
    def _nbytes(a):
        return int(a.size) * a.dtype.itemsize
    w_total = sum(_nbytes(a) for a in ep.values())
    per_layer = max(1, w_total // L)
    resident = (2 * w_total) <= int(0.3 * vmem_budget)   # 2x: pipelining buffers
    weight_buf = 2 * (w_total if resident else per_layer)

    # Rough per-batch-row VMEM footprint (activation blocks + f32/bf16 temps).
    per_row = 4 * S * (5 * D + 3 * D + 2 * d_ff + 6 * D) + 4 * n_heads * S * S * 3
    per_row = int(per_row * 1.5)
    avail = max(0, int(0.7 * vmem_budget) - weight_buf)
    tb_cap = max(1, avail // max(per_row, 1))

    # Aim for >=1024 flattened rows per step, capped by batch and VMEM.
    TB = max(1, min(BN, tb_cap, max(1, 1024 // S)))
    nb = _cdiv(BN, TB)
    if nb > 1 and nb % 2 == 1:
        nb += 1                                          # even split for v7x's 2 TCs
    TB = _cdiv(BN, nb)
    nb = _cdiv(BN, TB)
    BN_pad = nb * TB
    if BN_pad != BN:
        x = jnp.concatenate([x, jnp.zeros((BN_pad - BN, S, D), x.dtype)], axis=0)

    if resident:
        def wspec(shape):
            nd = len(shape) + 1
            return pl.BlockSpec((L,) + shape, lambda b, l, _nd=nd: (0,) * _nd)
    else:
        def wspec(shape):
            nz = len(shape)
            return pl.BlockSpec((1,) + shape, lambda b, l, _nz=nz: (l,) + (0,) * _nz)

    kern = functools.partial(encoder_layers_kernel, n_heads=n_heads,
                             resident=resident)
    out = pl.pallas_call(
        kern,
        grid=(nb, L),
        in_specs=[
            pl.BlockSpec((TB, S, D), lambda b, l: (b, 0, 0)),
            wspec((D, 3 * D)), wspec((1, 3 * D)),                 # wqkv, bqkv
            wspec((D, D)), wspec((1, D)),                         # wo, bo
            wspec((1, D)), wspec((1, D)),                         # ln1 g/b
            wspec((D, d_ff)), wspec((1, d_ff)),                   # w1, b1
            wspec((d_ff, D)), wspec((1, D)),                      # w2, b2
            wspec((1, D)), wspec((1, D)),                         # ln2 g/b
        ],
        out_specs=pl.BlockSpec((TB, S, D), lambda b, l: (b, 0, 0)),
        out_shape=jax.ShapeDtypeStruct((BN_pad, S, D), jnp.float32),
        scratch_shapes=[pltpu.VMEM((TB, S, D), jnp.float32)],
        compiler_params=pltpu.CompilerParams(
            dimension_semantics=("parallel", "arbitrary"),
            vmem_limit_bytes=vmem_budget),
    )(x, ep["wqkv_t"], ep["bqkv"], ep["wo_t"], ep["bo"],
      ep["ln1_g"], ep["ln1_b"], ep["w1_t"], ep["b1"],
      ep["w2_t"], ep["b2"], ep["ln2_g"], ep["ln2_b"])
    return out[:BN]


# --------------------------------------------------------------------------
# scale_block.forward
# --------------------------------------------------------------------------
def scale_block_forward(x, n_feat, kparams, win_size, n_heads):
    budget = _vmem_budget()
    if win_size > 1:
        x = seg_merging(x, n_feat, kparams["merge"], win_size, budget)
    x = x.reshape(-1, x.shape[-2], x.shape[-1])
    return transformer_encoder_layers(x, kparams["enc"], n_heads, budget)


# --------------------------------------------------------------------------
# Parameter init (f32, shapes per the PyTorch __init__) + kernel-side prep
# (stack layers, fuse qkv, fold attention scale into Wq/bq, cast weights bf16)
# --------------------------------------------------------------------------
def init_params(key, win_size, seg_dim, n_heads, d_ff, depth):
    ks = jax.random.split(key, 4 + depth)

    def w(k, shape, s=0.05):
        return s * jax.random.normal(k, shape, jnp.float32)

    params = {}
    if win_size > 1:
        wd = win_size * seg_dim
        params["merge"] = {
            "norm_g": 1.0 + 0.1 * jax.random.normal(ks[0], (1, wd), jnp.float32),
            "norm_b": 0.01 * jax.random.normal(ks[1], (1, wd), jnp.float32),
            "w_t": w(ks[2], (wd, seg_dim)),   # nn.Linear(wd, seg_dim).weight.T
            "b": w(ks[3], (1, seg_dim), 0.01),
        }
    layers = []
    for i in range(depth):
        kk = jax.random.split(ks[4 + i], 16)
        layers.append({
            "wq_t": w(kk[0], (seg_dim, seg_dim)),   # in_proj_weight[:D].T
            "wk_t": w(kk[1], (seg_dim, seg_dim)),
            "wv_t": w(kk[2], (seg_dim, seg_dim)),
            "bq":   w(kk[3], (1, seg_dim), 0.01),
            "bk":   w(kk[4], (1, seg_dim), 0.01),
            "bv":   w(kk[5], (1, seg_dim), 0.01),
            "wo_t": w(kk[6], (seg_dim, seg_dim)),   # out_proj.weight.T
            "bo":   w(kk[7], (1, seg_dim), 0.01),
            "ln1_g": 1.0 + 0.1 * jax.random.normal(kk[8], (1, seg_dim), jnp.float32),
            "ln1_b": 0.01 * jax.random.normal(kk[9], (1, seg_dim), jnp.float32),
            "w1_t": w(kk[10], (seg_dim, d_ff)),     # linear1.weight.T
            "b1":   w(kk[11], (1, d_ff), 0.01),
            "w2_t": w(kk[12], (d_ff, seg_dim)),     # linear2.weight.T
            "b2":   w(kk[13], (1, seg_dim), 0.01),
            "ln2_g": 1.0 + 0.1 * jax.random.normal(kk[14], (1, seg_dim), jnp.float32),
            "ln2_b": 0.01 * jax.random.normal(kk[15], (1, seg_dim), jnp.float32),
        })
    params["layers"] = layers
    return params


def prep_kernel_params(params, win_size, n_heads):
    kp = {}
    if win_size > 1:
        m = params["merge"]
        kp["merge"] = {
            "norm_g": m["norm_g"], "norm_b": m["norm_b"],
            "w_t": m["w_t"].astype(jnp.bfloat16), "b": m["b"],
        }
    layers = params["layers"]
    D = layers[0]["wq_t"].shape[0]
    hd = D // n_heads
    scale = jnp.float32(1.0 / np.sqrt(hd))

    def stk(key):
        return jnp.stack([l[key] for l in layers], axis=0)

    # Fused qkv weight/bias; attention scale folded into the q part.
    wqkv = jnp.concatenate([stk("wq_t") * scale, stk("wk_t"), stk("wv_t")],
                           axis=-1)                              # (L, D, 3D)
    bqkv = jnp.concatenate([stk("bq") * scale, stk("bk"), stk("bv")],
                           axis=-1)                              # (L, 1, 3D)
    kp["enc"] = {
        "wqkv_t": wqkv.astype(jnp.bfloat16),
        "bqkv":   bqkv,
        "wo_t": stk("wo_t").astype(jnp.bfloat16),
        "bo":   stk("bo"),
        "ln1_g": stk("ln1_g"), "ln1_b": stk("ln1_b"),
        "w1_t": stk("w1_t").astype(jnp.bfloat16), "b1": stk("b1"),
        "w2_t": stk("w2_t").astype(jnp.bfloat16), "b2": stk("b2"),
        "ln2_g": stk("ln2_g"), "ln2_b": stk("ln2_b"),
    }
    return kp


# --------------------------------------------------------------------------
# Pure-JAX f32 reference (mirrors PyTorch eval-mode forward)
# --------------------------------------------------------------------------
def ref_forward(x, n_feat, params, win_size, n_heads):
    if win_size > 1:
        bn, n_seg, seg_dim = x.shape
        B = bn // n_feat
        xr = x.reshape(B, n_feat, n_seg, seg_dim)
        pad = n_seg % win_size
        if pad != 0:
            pad = win_size - pad
            xr = jnp.concatenate([xr, xr[:, :, -pad:, :]], axis=-2)
        xr = jnp.concatenate([xr[:, :, i::win_size, :] for i in range(win_size)], axis=-1)
        p = params["merge"]
        xr = _layernorm(xr, p["norm_g"][0], p["norm_b"][0])
        xr = xr @ p["w_t"] + p["b"][0]
        x = xr.reshape(-1, xr.shape[-2], xr.shape[-1])
    else:
        x = x.reshape(-1, x.shape[-2], x.shape[-1])
    for p in params["layers"]:
        D = x.shape[-1]
        hd = D // n_heads
        q = x @ p["wq_t"] + p["bq"][0]
        k = x @ p["wk_t"] + p["bk"][0]
        v = x @ p["wv_t"] + p["bv"][0]

        def split(t):
            BN, S, _ = t.shape
            return t.reshape(BN, S, n_heads, hd).transpose(0, 2, 1, 3)

        qh, kh, vh = split(q) / np.sqrt(hd), split(k), split(v)
        s = jnp.einsum('bhqd,bhkd->bhqk', qh, kh)
        pw = jax.nn.softmax(s, axis=-1)
        ao = jnp.einsum('bhqk,bhkd->bhqd', pw, vh)
        BN, H, S, _ = ao.shape
        ao = ao.transpose(0, 2, 1, 3).reshape(BN, S, D)
        ao = ao @ p["wo_t"] + p["bo"][0]
        x1 = _layernorm(x + ao, p["ln1_g"][0], p["ln1_b"][0])
        h = jax.nn.relu(x1 @ p["w1_t"] + p["b1"][0])
        h = h @ p["w2_t"] + p["b2"][0]
        x = _layernorm(x1 + h, p["ln2_g"][0], p["ln2_b"][0])
    return x


if __name__ == "__main__":
    # small shapes consistent with the module's forward
    B, n_feat, n_seg, seg_dim = 2, 4, 8, 32
    win_size, n_heads, d_ff, depth = 2, 4, 64, 2

    key = jax.random.PRNGKey(0)
    kx, kp = jax.random.split(key)
    # forward input layout: (B * n_feat, n_seg, seg_dim)
    x = jax.random.normal(kx, (B * n_feat, n_seg, seg_dim), jnp.float32)
    params = init_params(kp, win_size, seg_dim, n_heads, d_ff, depth)
    kparams = prep_kernel_params(params, win_size, n_heads)

    out = scale_block_forward(x, n_feat, kparams, win_size, n_heads)
    out = jax.block_until_ready(out)

    ref = ref_forward(x, n_feat, params, win_size, n_heads)
    # bf16 MXU operands (f32 accumulation) + approx-reciprocal softmax => looser
    # tolerance than the pure-f32 path.
    np.testing.assert_allclose(np.asarray(out), np.asarray(ref), rtol=2e-2, atol=2e-2)
    print("KERNEL_OK")
</pallas_src>

<mosaic_0001>
module attributes {stable_mosaic.version = 11 : i64} {
  func.func @seg_merge_kernel(%arg0: i32, %arg1: memref<16x64xf32, #tpu.memory_space<vmem>>, %arg2: memref<1x64xf32, #tpu.memory_space<vmem>>, %arg3: memref<1x64xf32, #tpu.memory_space<vmem>>, %arg4: memref<64x32xbf16, #tpu.memory_space<vmem>>, %arg5: memref<1x32xf32, #tpu.memory_space<vmem>>, %arg6: memref<16x32xf32, #tpu.memory_space<vmem>>) attributes {dimension_semantics = [#tpu.dimension_semantics<parallel>], iteration_bounds = array<i64: 2>, scalar_prefetch = 0 : i64, scratch_operands = 0 : i64, tpu.core_type = #tpu.core_type<tc>, window_params = [{transform_indices = @transform_0, window_bounds = array<i64: 16, 64>}, {pipeline_mode = #tpu.pipeline_mode<synchronous>, transform_indices = @transform_1, window_bounds = array<i64: 1, 64>}, {pipeline_mode = #tpu.pipeline_mode<synchronous>, transform_indices = @transform_2, window_bounds = array<i64: 1, 64>}, {pipeline_mode = #tpu.pipeline_mode<synchronous>, transform_indices = @transform_3, window_bounds = array<i64: 64, 32>}, {pipeline_mode = #tpu.pipeline_mode<synchronous>, transform_indices = @transform_4, window_bounds = array<i64: 1, 32>}, {transform_indices = @transform_5, window_bounds = array<i64: 16, 32>}]} {
    %c0 = arith.constant 0 : index
    %c0_0 = arith.constant 0 : index
    %0 = vector.load %arg1[%c0, %c0_0] : memref<16x64xf32, #tpu.memory_space<vmem>>, vector<16x64xf32>
    %c0_1 = arith.constant 0 : index
    %c0_2 = arith.constant 0 : index
    %1 = vector.load %arg2[%c0_1, %c0_2] : memref<1x64xf32, #tpu.memory_space<vmem>>, vector<1x64xf32>
    %c0_3 = arith.constant 0 : index
    %c0_4 = arith.constant 0 : index
    %2 = vector.load %arg3[%c0_3, %c0_4] : memref<1x64xf32, #tpu.memory_space<vmem>>, vector<1x64xf32>
    %cst = arith.constant dense<0.000000e+00> : vector<16xf32>
    %3 = vector.multi_reduction <add>, %0, %cst [1] : vector<16x64xf32> to vector<16xf32>
    %4 = vector.shape_cast %3 : vector<16xf32> to vector<16x1xf32>
    %cst_5 = arith.constant 6.400000e+01 : f32
    %5 = vector.broadcast %cst_5 : f32 to vector<16x1xf32>
    %6 = arith.divf %4, %5 : vector<16x1xf32>
    %7 = vector.broadcast %6 : vector<16x1xf32> to vector<16x64xf32>
    %8 = arith.subf %0, %7 : vector<16x64xf32>
    %9 = arith.mulf %8, %8 : vector<16x64xf32>
    %cst_6 = arith.constant dense<0.000000e+00> : vector<16xf32>
    %10 = vector.multi_reduction <add>, %9, %cst_6 [1] : vector<16x64xf32> to vector<16xf32>
    %11 = vector.shape_cast %10 : vector<16xf32> to vector<16x1xf32>
    %cst_7 = arith.constant 6.400000e+01 : f32
    %12 = vector.broadcast %cst_7 : f32 to vector<16x1xf32>
    %13 = arith.divf %11, %12 : vector<16x1xf32>
    %14 = vector.broadcast %6 : vector<16x1xf32> to vector<16x64xf32>
    %15 = arith.subf %0, %14 : vector<16x64xf32>
    %cst_8 = arith.constant 9.99999974E-6 : f32
    %16 = vector.broadcast %cst_8 : f32 to vector<16x1xf32>
    %17 = arith.addf %13, %16 : vector<16x1xf32>
    %18 = math.rsqrt %17 : vector<16x1xf32>
    %19 = vector.broadcast %18 : vector<16x1xf32> to vector<16x64xf32>
    %20 = arith.mulf %15, %19 : vector<16x64xf32>
    %21 = vector.broadcast %1 : vector<1x64xf32> to vector<16x64xf32>
    %22 = arith.mulf %20, %21 : vector<16x64xf32>
    %23 = vector.broadcast %2 : vector<1x64xf32> to vector<16x64xf32>
    %24 = arith.addf %22, %23 : vector<16x64xf32>
    %25 = arith.truncf %24 : vector<16x64xf32> to vector<16x64xbf16>
    %c0_9 = arith.constant 0 : index
    %c0_10 = arith.constant 0 : index
    %26 = vector.load %arg4[%c0_9, %c0_10] : memref<64x32xbf16, #tpu.memory_space<vmem>>, vector<64x32xbf16>
    %cst_11 = arith.constant dense<0.000000e+00> : vector<16x32xf32>
    %27 = tpu.matmul %25, %26, %cst_11 {dimension_numbers = #tpu.dot_dimension_numbers<[1], [0], [0], [1], [0, 0, 1, 1], [], []>} : vector<16x64xbf16>, vector<64x32xbf16>, vector<16x32xf32> -> vector<16x32xf32>
    %c0_12 = arith.constant 0 : index
    %c0_13 = arith.constant 0 : index
    %28 = vector.load %arg5[%c0_12, %c0_13] : memref<1x32xf32, #tpu.memory_space<vmem>>, vector<1x32xf32>
    %29 = vector.broadcast %28 : vector<1x32xf32> to vector<16x32xf32>
    %30 = arith.addf %27, %29 : vector<16x32xf32>
    %c0_14 = arith.constant 0 : index
    %c0_15 = arith.constant 0 : index
    %31 = vector.load %arg6[%c0_14, %c0_15] : memref<16x32xf32, #tpu.memory_space<vmem>>, vector<16x32xf32>
    tpu.vector_store %arg6[%c0_14, %c0_15], %30 {strides = array<i32>} : memref<16x32xf32, #tpu.memory_space<vmem>>, vector<16x32xf32>,
    return
  }
  func.func @transform_0(%arg0: i32) -> (i32, i32) {
    %c0_i32 = arith.constant 0 : i32
    %c0_i32_0 = arith.constant 0 : i32
    return %arg0, %c0_i32 : i32, i32
  }
  func.func @transform_1(%arg0: i32) -> (i32, i32) {
    %c0_i32 = arith.constant 0 : i32
    %c0_i32_0 = arith.constant 0 : i32
    %c0_i32_1 = arith.constant 0 : i32
    return %c0_i32, %c0_i32_0 : i32, i32
  }
  func.func @transform_2(%arg0: i32) -> (i32, i32) {
    %c0_i32 = arith.constant 0 : i32
    %c0_i32_0 = arith.constant 0 : i32
    %c0_i32_1 = arith.constant 0 : i32
    return %c0_i32, %c0_i32_0 : i32, i32
  }
  func.func @transform_3(%arg0: i32) -> (i32, i32) {
    %c0_i32 = arith.constant 0 : i32
    %c0_i32_0 = arith.constant 0 : i32
    %c0_i32_1 = arith.constant 0 : i32
    return %c0_i32, %c0_i32_0 : i32, i32
  }
  func.func @transform_4(%arg0: i32) -> (i32, i32) {
    %c0_i32 = arith.constant 0 : i32
    %c0_i32_0 = arith.constant 0 : i32
    %c0_i32_1 = arith.constant 0 : i32
    return %c0_i32, %c0_i32_0 : i32, i32
  }
  func.func @transform_5(%arg0: i32) -> (i32, i32) {
    %c0_i32 = arith.constant 0 : i32
    %c0_i32_0 = arith.constant 0 : i32
    return %arg0, %c0_i32 : i32, i32
  }
}

</mosaic_0001>

<llo_original>
// kernel: tpu_custom_call.1
$region0: #{tpu_custom_call.1}
  #allocation0 [shape = 'u32[]', space=smem, size = 0x4, offset = 0x4, fixed_abs, tag = 'smem constant byte address 0x4 - core index']
  #allocation1 [shape = 'u32[144,128]{1,0:T(1,128)}', space=vmem, size = 0x12000, scoped, tag = 'internal scratch']
  %s0 = inlined_call_operand.vmem [shape: f32[32,64], index: 0, kind: input, shape index: {}]
  %s1 = inlined_call_operand.vmem [shape: f32[1,64], index: 1, kind: input, shape index: {}]
  %s2 = inlined_call_operand.vmem [shape: f32[1,64], index: 2, kind: input, shape index: {}]
  %s3 = inlined_call_operand.vmem [shape: bf16[64,32], index: 3, kind: input, shape index: {}]
  %s4 = inlined_call_operand.vmem [shape: f32[1,32], index: 4, kind: input, shape index: {}]
  %s5 = inlined_call_operand.hbm [shape: f32[32,32], index: 5, kind: output, shape index: {}]
  %s6 = sld [smem:[#allocation0]]
  $region53: #{tpu_custom_call.1} parent=0
    _
  %s8 = ssub.s32 1, %s6
  %s9 = scalar_select 0, %s8, %s6
  $region1: #{tpu_custom_call.1} parent=0
    #allocation2 [shape = 'u8[16384]{0}', space=vmem, size = 0x4000, scoped, tag = 'output window, operand 0']
    #allocation3 [shape = 's32[2]{0}', space=sflag, size = 0x8, scoped, tag = 'scoped memory for tpu_custom_call.1']
    %10 = vsyncpa [#allocation3], 0
    %s11 = scalar_lea.sflag [#allocation3], 1
    %12 = vsyncpa %s11, 0
    loop: start=0, step=1, limit=4
    $region2: #{tpu_custom_call.1} parent=1 // loop_pre_header
      _
    $region3: #{tpu_custom_call.1} parent=1 // loop_header
      %s14 = sphi 0, %s18
      %p15 = scmp.ge.s32.totalorder %s14, 4
      %s24 = sphi 0, %s26
      %s27 = sphi 0, %s24
      %s28 = sphi 0, %s27
      %s44 = sphi 0, %s28
      %s48 = sphi 0, %s48
      %s50 = sphi 0, %s48
      %s51 = sphi 0, %s50
      %s65 = sphi 0, %s51
      %s69 = sphi 0, %s69
      %s71 = sphi 0, %s69
      %s72 = sphi 0, %s71
      %s86 = sphi 0, %s72
      %s90 = sphi 0, %s90
      %s92 = sphi 0, %s90
      %s93 = sphi 0, %s92
      %s107 = sphi 0, %s93
      %s111 = sphi 0, %s111
      %s113 = sphi 0, %s111
      %s114 = sphi 0, %s113
      %s128 = sphi 0, %s114
      %s134 = sphi 0, %s136
      %s137 = sphi 0, %s134
      %s138 = sphi 0, %s137
      %s154 = sphi 0, %s138
    $region4: #{tpu_custom_call.1} parent=1 // loop_header_branch
      %17 = sbr.rel (%p15) target = $region8
    $region5: #{tpu_custom_call.1} parent=1 // loop_body
      %s19 = ssub.s32 %s14, 1
      %s20 = ssub.s32 %s14, 2
      %s21 = sadd.s32 %s14, 1
      %s22 = ssub.s32 %s14, %s21
      %p23 = scmp.eq.s32.totalorder %s22, 0
      %s25 = sadd.s32 %s24, 1
      %s26 = scalar_select %p23, %s24, %s25
      %p29 = pneg %p23
      %p30 = scmp.eq.s32.totalorder %s14, 1
      %p31 = por %p29, %p30
      %p32 = scmp.ne.s32.totalorder %s24, %s27
      %p33 = scmp.eq.s32.totalorder %s14, 0
      %p34 = por %p32, %p33
      %p35 = scmp.ne.s32.totalorder %s24, %s27
      %p36 = scmp.eq.s32.totalorder %s19, 1
      %p37 = por %p35, %p36
      %p38 = scmp.ne.s32.totalorder %s27, %s28
      %p39 = scmp.eq.s32.totalorder %s19, 0
      %p40 = por %p38, %p39
      %p41 = scmp.ne.s32.totalorder %s27, %s28
      %p42 = scmp.eq.s32.totalorder %s20, 1
      %p43 = por %p41, %p42
      %p45 = scmp.ne.s32.totalorder %s28, %s44
      %p46 = scmp.eq.s32.totalorder %s20, 0
      %p47 = por %p45, %p46
      %s49 = sadd.s32 %s48, 1
      %p52 = scmp.eq.s32.totalorder %s14, 1
      %p53 = scmp.ne.s32.totalorder %s48, %s50
      %p54 = scmp.eq.s32.totalorder %s14, 0
      %p55 = por %p53, %p54
      %p56 = scmp.ne.s32.totalorder %s48, %s50
      %p57 = scmp.eq.s32.totalorder %s19, 1
      %p58 = por %p56, %p57
      %p59 = scmp.ne.s32.totalorder %s50, %s51
      %p60 = scmp.eq.s32.totalorder %s19, 0
      %p61 = por %p59, %p60
      %p62 = scmp.ne.s32.totalorder %s50, %s51
      %p63 = scmp.eq.s32.totalorder %s20, 1
      %p64 = por %p62, %p63
      %p66 = scmp.ne.s32.totalorder %s51, %s65
      %p67 = scmp.eq.s32.totalorder %s20, 0
      %p68 = por %p66, %p67
      %s70 = sadd.s32 %s69, 1
      %p73 = scmp.eq.s32.totalorder %s14, 1
      %p74 = scmp.ne.s32.totalorder %s69, %s71
      %p75 = scmp.eq.s32.totalorder %s14, 0
      %p76 = por %p74, %p75
      %p77 = scmp.ne.s32.totalorder %s69, %s71
      %p78 = scmp.eq.s32.totalorder %s19, 1
      %p79 = por %p77, %p78
      %p80 = scmp.ne.s32.totalorder %s71, %s72
      %p81 = scmp.eq.s32.totalorder %s19, 0
      %p82 = por %p80, %p81
      %p83 = scmp.ne.s32.totalorder %s71, %s72
      %p84 = scmp.eq.s32.totalorder %s20, 1
      %p85 = por %p83, %p84
      %p87 = scmp.ne.s32.totalorder %s72, %s86
      %p88 = scmp.eq.s32.totalorder %s20, 0
      %p89 = por %p87, %p88
      %s91 = sadd.s32 %s90, 1
      %p94 = scmp.eq.s32.totalorder %s14, 1
      %p95 = scmp.ne.s32.totalorder %s90, %s92
      %p96 = scmp.eq.s32.totalorder %s14, 0
      %p97 = por %p95, %p96
      %p98 = scmp.ne.s32.totalorder %s90, %s92
      %p99 = scmp.eq.s32.totalorder %s19, 1
      %p100 = por %p98, %p99
      %p101 = scmp.ne.s32.totalorder %s92, %s93
      %p102 = scmp.eq.s32.totalorder %s19, 0
      %p103 = por %p101, %p102
      %p104 = scmp.ne.s32.totalorder %s92, %s93
      %p105 = scmp.eq.s32.totalorder %s20, 1
      %p106 = por %p104, %p105
      %p108 = scmp.ne.s32.totalorder %s93, %s107
      %p109 = scmp.eq.s32.totalorder %s20, 0
      %p110 = por %p108, %p109
      %s112 = sadd.s32 %s111, 1
      %p115 = scmp.eq.s32.totalorder %s14, 1
      %p116 = scmp.ne.s32.totalorder %s111, %s113
      %p117 = scmp.eq.s32.totalorder %s14, 0
      %p118 = por %p116, %p117
      %p119 = scmp.ne.s32.totalorder %s111, %s113
      %p120 = scmp.eq.s32.totalorder %s19, 1
      %p121 = por %p119, %p120
      %p122 = scmp.ne.s32.totalorder %s113, %s114
      %p123 = scmp.eq.s32.totalorder %s19, 0
      %p124 = por %p122, %p123
      %p125 = scmp.ne.s32.totalorder %s113, %s114
      %p126 = scmp.eq.s32.totalorder %s20, 1
      %p127 = por %p125, %p126
      %p129 = scmp.ne.s32.totalorder %s114, %s128
      %p130 = scmp.eq.s32.totalorder %s20, 0
      %p131 = por %p129, %p130
      %s132 = ssub.s32 %s14, %s21
      %p133 = scmp.eq.s32.totalorder %s132, 0
      %s135 = sadd.s32 %s134, 1
      %s136 = scalar_select %p133, %s134, %s135
      %p139 = pneg %p133
      %p140 = scmp.eq.s32.totalorder %s14, 1
      %p141 = por %p139, %p140
      %p142 = scmp.ne.s32.totalorder %s134, %s137
      %p143 = scmp.eq.s32.totalorder %s14, 0
      %p144 = por %p142, %p143
      %p145 = scmp.ne.s32.totalorder %s134, %s137
      %p146 = scmp.eq.s32.totalorder %s19, 1
      %p147 = por %p145, %p146
      %p148 = scmp.ne.s32.totalorder %s137, %s138
      %p149 = scmp.eq.s32.totalorder %s19, 0
      %p150 = por %p148, %p149
      %p151 = scmp.ne.s32.totalorder %s137, %s138
      %p152 = scmp.eq.s32.totalorder %s20, 1
      %p153 = por %p151, %p152
      %p155 = scmp.ne.s32.totalorder %s138, %s154
      %p156 = scmp.eq.s32.totalorder %s20, 0
      %p157 = por %p155, %p156
      %p158 = scmp.le.s32.totalorder 1, %s14
      %p159 = scmp.lt.s32.totalorder %s14, 3
      %p160 = pnand %p158, %p159
      %p161 = pneg %p160
      // Predicated region
      $region9: #{tpu_custom_call.1} parent=5 // pred_check
        _
      $region10: #{tpu_custom_call.1} parent=5 // pred_check_branch
        %163 = sbr.rel (%p160) target = $region12
      $region11: #{tpu_custom_call.1} parent=5 // pred_region
        %s164 = ssub.s32 %s14, 1
        // Predicated region
        $region13: #{tpu_custom_call.1} parent=11 // pred_check
          %p165 = pneg %p61
        $region14: #{tpu_custom_call.1} parent=11 // pred_check_branch
          %167 = sbr.rel (%p165) target = $region16
        $region15: #{tpu_custom_call.1} parent=11 // pred_region
          _
        $region16: #{tpu_custom_call.1} parent=11 // pred_fallthru
          _
        // Predicated region
        $region17: #{tpu_custom_call.1} parent=11 // pred_check
          %p168 = pneg %p82
        $region18: #{tpu_custom_call.1} parent=11 // pred_check_branch
          %170 = sbr.rel (%p168) target = $region20
        $region19: #{tpu_custom_call.1} parent=11 // pred_region
          _
        $region20: #{tpu_custom_call.1} parent=11 // pred_fallthru
          _
        // Predicated region
        $region21: #{tpu_custom_call.1} parent=11 // pred_check
          %p171 = pneg %p103
        $region22: #{tpu_custom_call.1} parent=11 // pred_check_branch
          %173 = sbr.rel (%p171) target = $region24
        $region23: #{tpu_custom_call.1} parent=11 // pred_region
          _
        $region24: #{tpu_custom_call.1} parent=11 // pred_fallthru
          _
        // Predicated region
        $region25: #{tpu_custom_call.1} parent=11 // pred_check
          %p174 = pneg %p124
        $region26: #{tpu_custom_call.1} parent=11 // pred_check_branch
          %176 = sbr.rel (%p174) target = $region28
        $region27: #{tpu_custom_call.1} parent=11 // pred_region
          _
        $region28: #{tpu_custom_call.1} parent=11 // pred_fallthru
          _
      $region12: #{tpu_custom_call.1} parent=5 // pred_fallthru
        _
      %p177 = scmp.lt.s32.totalorder %s14, 2
      // Predicated region
      $region29: #{tpu_custom_call.1} parent=5 // pred_check
        %p178 = pneg %p177
      $region30: #{tpu_custom_call.1} parent=5 // pred_check_branch
        %180 = sbr.rel (%p178) target = $region32
      $region31: #{tpu_custom_call.1} parent=5 // pred_region
        // Predicated region
        $region33: #{tpu_custom_call.1} parent=31 // pred_check
          %p181 = pneg %p34
        $region34: #{tpu_custom_call.1} parent=31 // pred_check_branch
          %183 = sbr.rel (%p181) target = $region36
        $region35: #{tpu_custom_call.1} parent=31 // pred_region
          %s184 = smul.u32 2, %s14
          %p185 = scmp.lt.s32.totalorder %s184, 3
          %s186 = scalar_select %p185, %s184, 3
          %s187 = smul.addr %s186, 8
          %s188 = scalar_lea.vmem %s0, %s187
          %s189 = smul.u32 2, %s14
        $region36: #{tpu_custom_call.1} parent=31 // pred_fallthru
          _
      $region32: #{tpu_custom_call.1} parent=5 // pred_fallthru
        _
      %p190 = scmp.le.s32.totalorder 1, %s14
      %p191 = scmp.lt.s32.totalorder %s14, 3
      %p192 = pnand %p190, %p191
      %p193 = pneg %p192
      // Predicated region
      $region37: #{tpu_custom_call.1} parent=5 // pred_check
        _
      $region38: #{tpu_custom_call.1} parent=5 // pred_check_branch
        %195 = sbr.rel (%p192) target = $region40
      $region39: #{tpu_custom_call.1} parent=5 // pred_region
        %s196 = ssub.s32 %s14, 1
        %s197 = smul.u32 2, %s19
        %p198 = scmp.lt.s32.totalorder %s197, 3
        %s199 = scalar_select %p198, %s197, 3
        %s200 = smul.addr %s199, 8
        %s201 = scalar_lea.vmem %s0, %s200
        %p202 = pneg %p40
        %p203 = pneg %p37
        %p204 = pneg %p61
        %p205 = pneg %p58
        %p206 = pneg %p82
        %p207 = pneg %p79
        %p208 = pneg %p103
        %p209 = pneg %p100
        %p210 = pneg %p124
        %p211 = pneg %p121
        %p212 = pneg %p150
        %p213 = pneg %p147
        %s214 = sand.u32 %s137, 1
        %s215 = scalar_lea.sflag [#allocation3], %s214
        %s216 = sand.u32 %s137, 1
        %s217 = smul.addr %s216, 16
        %s218 = scalar_lea.vmem [#allocation2], %s217
        %s219 = smul.u32 2, %s19
        %p220 = scmp.lt.s32.totalorder %s219, 3
        %s221 = scalar_select %p220, %s219, 3
        %s222 = smul.addr %s221, 8
        %s223 = scalar_lea.vmem %s0, %s222
        %s224 = smul.u32 2, %s19
        %s225 = smul.u32 2, %s19
        %v227 = vld [vmem:[%s223] sm:$0xff]
        %v228 = vld [vmem:[%s223 + $0x8] sm:$0xff]
        %v229 = vld [vmem:[%s1] sm:$0x1]
        %v230 = vld [vmem:[%s2] sm:$0x1]
        %vm231 = vcmask 523264
        %v232 = vsel %vm231, %v227, 0.0
        %233 = vadd.xlane.f32.xlu0 %v232
        %v234 = vpop.xlane.xlu0 %233
        %v235 = vsel %vm231, %v228, 0.0
        %236 = vadd.xlane.f32.xlu0 %v235
        %v237 = vpop.xlane.xlu0 %236
        %v238 = vrcp.pop 64.0
        %v239 = vmul.f32 %v234, %v238
        %v240 = vmul.f32 %v237, %v238
        %v241 = vsub.f32 %v227, %v239
        %v242 = vsub.f32 %v228, %v240
        %v243 = vmul.f32 %v241, %v241
        %v244 = vmul.f32 %v242, %v242
        %v245 = vsel %vm231, %v243, 0.0
        %246 = vadd.xlane.f32.xlu0 %v245
        %v247 = vpop.xlane.xlu0 %246
        %v248 = vsel %vm231, %v244, 0.0
        %249 = vadd.xlane.f32.xlu0 %v248
        %v250 = vpop.xlane.xlu0 %249
        %v251 = vmul.f32 %v247, %v238
        %v252 = vmul.f32 %v250, %v238
        %v253 = vadd.f32 %v251, 1e-05
        %v254 = vadd.f32 %v252, 1e-05
        %v255 = vrsqrt.pop %v253
        %v256 = vrsqrt.pop %v254
        %v257 = vmul.f32 %v241, %v255
        %v258 = vmul.f32 %v242, %v256
        %v260 = vlaneseq
        %v261 = vshrl.u32 %v260, 7
        %v262 = vsub.s32 0, %v261
        %v263 = vrot.slane %v229, %v262
        %v265 = vmul.f32 %v257, %v263
        %v266 = vmul.f32 %v258, %v263
        %v268 = vlaneseq
        %v269 = vshrl.u32 %v268, 7
        %v270 = vsub.s32 0, %v269
        %v271 = vrot.slane %v230, %v270
        %v273 = vadd.f32 %v265, %v271
        %v274 = vadd.f32 %v266, %v271
        %v275 = vpack.c.bf16 %v274, %v273
        %v276 = vld [vmem:[%s3] sm:$0xf]
        %v277 = vld [vmem:[%s3 + $0x4] sm:$0xf]
        %v278 = vld [vmem:[%s3 + $0x8] sm:$0xf]
        %v279 = vld [vmem:[%s3 + $0xc] sm:$0xf]
        %v280 = vld [vmem:[%s3 + $0x10] sm:$0xf]
        %v281 = vld [vmem:[%s3 + $0x14] sm:$0xf]
        %v282 = vld [vmem:[%s3 + $0x18] sm:$0xf]
        %v283 = vld [vmem:[%s3 + $0x1c] sm:$0xf]
        %v284 = vld [vmem:[%s4] sm:$0x1]
        %v286 = vlaneseq
        %v287 = vshrl.u32 %v286, 7
        %v288 = vsub.s32 0, %v287
        %v289 = vrot.slane %v284, %v288
        %v299 = vunpack.c.l.b16 %v276
        %v300 = vunpack.c.l.b16 %v277
        %v301 = vunpack.c.l.b16 %v278
        %v302 = vunpack.c.l.b16 %v279
        %v303 = vunpack.c.l.b16 %v280
        %v304 = vunpack.c.l.b16 %v281
        %v305 = vunpack.c.l.b16 %v282
        %v306 = vunpack.c.l.b16 %v283
        %v307 = vpack.c.b16 %v300, %v299
        %v308 = vpack.c.b16 %v302, %v301
        %v309 = vpack.c.b16 %v304, %v303
        %v310 = vpack.c.b16 %v306, %v305
        %v316 = vsel %vm231, %v275, 0
        %318 = vmatprep.subr.bf16.mxu0 0
        %319 = vmatpush1.bf16.msra.mxu0 0
        %320 = vmatprep.subr.bf16.mxu0 0
        %321 = vmatpush1.bf16.msra.mxu0 0
        %322 = vmatprep.subr.bf16.mxu0 0
        %323 = vmatpush1.bf16.msra.mxu0 0
        %324 = vmatprep.subr.bf16.mxu0 0
        %325 = vmatpush1.bf16.msra.mxu0 0
        %326 = vmatprep.subr.bf16.mxu0 0
        %327 = vmatpush1.bf16.msra.mxu0 %v310
        %328 = vmatprep.subr.bf16.mxu0 0
        %329 = vmatpush1.bf16.msra.mxu0 %v309
        %330 = vmatprep.subr.bf16.mxu0 0
        %331 = vmatpush1.bf16.msra.mxu0 %v308
        %332 = vmatprep.subr.bf16.mxu0 0
        %333 = vmatpush1.bf16.msra.mxu0 %v307
        %334 = vmatprep.subr.bf16.mxu0 0
        %335 = vmatpush2.bf16.msra.mxu0 0
        %336 = vmatprep.subr.bf16.mxu0 0
        %337 = vmatpush2.bf16.msra.mxu0 0
        %338 = vmatprep.subr.bf16.mxu0 0
        %339 = vmatpush2.bf16.msra.mxu0 0
        %340 = vmatprep.subr.bf16.mxu0 0
        %341 = vmatpush2.bf16.msra.mxu0 0
        %342 = vmatprep.subr.bf16.mxu0 0
        %343 = vmatpush2.bf16.msra.mxu0 0
        %344 = vmatprep.subr.bf16.mxu0 0
        %345 = vmatpush2.bf16.msra.mxu0 0
        %346 = vmatprep.subr.bf16.mxu0 0
        %347 = vmatpush2.bf16.msra.mxu0 0
        %348 = vmatprep.subr.bf16.mxu0 0
        %349 = vmatpush2.bf16.msra.mxu0 0
        %350 = vmatprep.mubr.bf16.mxu0 0
        %351 = vmatmul.mubr.bf16.gmra.mxu0 %v316
        %v352 = vpop.f32.mrf.mxu0
        %v353 = vadd.f32 %v289, %v352
        %v354 = vpop.f32.mrf.mxu0
        %v355 = vpop.f32.mrf.mxu0
        %v356 = vadd.f32 %v289, %v355
        %v357 = vpop.f32.mrf.mxu0
        %358 = vdwg.mxu0
        %vm359 = vcmask 261120
        %360 = vst.msk [vmem:[%s218] sm:$0xff] %vm359, %v353
        %361 = vst.msk [vmem:[%s218 + $0x8] sm:$0xff] %vm359, %v356
        %s362 = sand.u32 %s137, 1
        %s363 = scalar_lea.sflag [#allocation3], %s362
        %s364 = sand.u32 %s137, 1
        %s365 = smul.addr %s364, 16
        %s366 = scalar_lea.vmem [#allocation2], %s365
        // Predicated region
        $region41: #{tpu_custom_call.1} parent=39 // pred_check
          %p367 = pneg %p147
        $region42: #{tpu_custom_call.1} parent=39 // pred_check_branch
          %369 = sbr.rel (%p367) target = $region44
        $region43: #{tpu_custom_call.1} parent=39 // pred_region
          %s370 = smul.u32 2, %s19
          %s372 = ssub.s32 256, 256
          %373 = vsyncadd %s363, %s372
          %s374 = smul.addr %s370, 128
          %s375 = scalar_lea.hbm %s5, %s374
          %s376 = sshll.u32 %s366, 4
          %s377 = int_to_ptr.vmem [resolvable:$true] %s376
          %382 = dma.vmem_to_hbm [thread:$0]  %s377, 256, %s375, %s363, 128, 128, 8
        $region44: #{tpu_custom_call.1} parent=39 // pred_fallthru
          _
      $region40: #{tpu_custom_call.1} parent=5 // pred_fallthru
        _
      %p383 = scmp.le.s32.totalorder 2, %s14
      // Predicated region
      $region45: #{tpu_custom_call.1} parent=5 // pred_check
        %p384 = pneg %p383
      $region46: #{tpu_custom_call.1} parent=5 // pred_check_branch
        %386 = sbr.rel (%p384) target = $region48
      $region47: #{tpu_custom_call.1} parent=5 // pred_region
        %s387 = ssub.s32 %s14, 2
        // Predicated region
        $region49: #{tpu_custom_call.1} parent=47 // pred_check
          %p388 = pneg %p153
        $region50: #{tpu_custom_call.1} parent=47 // pred_check_branch
          %390 = sbr.rel (%p388) target = $region52
        $region51: #{tpu_custom_call.1} parent=47 // pred_region
          %s391 = sand.u32 %s138, 1
          %s392 = scalar_lea.sflag [#allocation3], %s391
          %s393 = sand.u32 %s138, 1
          %s394 = smul.addr %s393, 16
          %s395 = scalar_lea.vmem [#allocation2], %s394
          %396 = dma.done %s392, 256
        $region52: #{tpu_custom_call.1} parent=47 // pred_fallthru
          _
      $region48: #{tpu_custom_call.1} parent=5 // pred_fallthru
        _
    $region6: #{tpu_custom_call.1} parent=1 // loop_footer
      %s18 = sadd.s32 1, %s14
    $region7: #{tpu_custom_call.1} parent=1 // loop_footer_branch
      %13 = sbr.rel target = $region3
    $region8: #{tpu_custom_call.1} parent=1 // loop_exit
      _
    %397 = vsyncpa [#allocation3], 1
    %s398 = scalar_lea.sflag [#allocation3], 1
    %399 = vsyncpa %s398, 1

</llo_original>
